<compile_context>
chip_gen: v5e
topology: v5e:2x2
jax: 0.10.0
libtpu: 0.0.40
codegen_flags: <defaults>
</compile_context>

<pallas_src>
import functools

import jax
import jax.numpy as jnp
import numpy as np
from jax.experimental import pallas as pl
from jax.experimental.pallas import tpu as pltpu


# --------------------------------------------------------------------------- #
# Kernel
# --------------------------------------------------------------------------- #
def resblock_kernel(x_ref, w1r_ref, b1r_ref, w2_ref, b2_ref, o_ref):
    """nb images per grid step, lane-packed (rows, W*C) layout.

    x_ref  : (nb, H, W*Cin_p)       f32 activations, channels packed on lanes
    w1r_ref: (3*W*Cin_p, 2*W*Cout)  bf16 conv1 + 1x1-residual fused packed weight
    b1r_ref: (1, 2*W*Cout)          f32  [b1 | br] tiled over W
    w2_ref : (3*W*Cout,  W*Cout)    bf16 conv2 packed weight
    b2_ref : (1, W*Cout)            f32
    o_ref  : (nb, H, W*Cout)        f32
    """
    nb, img_h, _ = x_ref.shape
    wcout = o_ref.shape[2]
    m = nb * img_h

    x = x_ref[...].reshape(m, x_ref.shape[2])          # (m, W*Cin_p), lane-dense

    def shifted_rows(a):
        # dy-major contraction operand [a[r-1] | a[r] | a[r+1]] built with XLU
        # rolls + VPU border masks (no sublane-misaligned slice copies).
        # pltpu.roll is a rotation; the wrapped rows are exactly the per-image
        # border rows that the mask zeroes (the conv zero padding in y), and the
        # same mask zeroes rows that would bleed across stacked images.
        row = jax.lax.broadcasted_iota(jnp.int32, a.shape, 0)
        zero = jnp.zeros_like(a)
        up = jnp.where(row % img_h == 0, zero, pltpu.roll(a, shift=1, axis=0))
        dn = jnp.where(row % img_h == img_h - 1, zero,
                       pltpu.roll(a, shift=a.shape[0] - 1, axis=0))
        return jnp.concatenate([up, a, dn], axis=1)

    # ---- conv1 (3x3, pad=1) + 1x1 residual conv, fused into ONE MXU matmul ----
    # output columns [0 : W*Cout] = conv1, [W*Cout : 2*W*Cout] = residual branch.
    lhs1 = shifted_rows(x).astype(jnp.bfloat16)                  # (m, 3*W*Cin_p)
    h1res = jnp.dot(lhs1, w1r_ref[...],
                    preferred_element_type=jnp.float32) + b1r_ref[...]
    h1 = jnp.maximum(h1res[:, :wcout], 0.0)                      # ReLU(conv1)
    res = h1res[:, wcout:]                                       # residual branch

    # ---- conv2 (3x3, pad=1): one MXU matmul ----
    lhs2 = shifted_rows(h1).astype(jnp.bfloat16)                 # (m, 3*W*Cout)
    out = jnp.dot(lhs2, w2_ref[...],
                  preferred_element_type=jnp.float32) + b2_ref[...]

    # residual add + final ReLU, lane-dense (W*Cout = 128) store
    o_ref[...] = (jnp.maximum(out + res, 0.0)
                  .reshape(nb, img_h, wcout).astype(o_ref.dtype))


# --------------------------------------------------------------------------- #
# One-time weight packing (hoisted out of the per-call forward path)
# --------------------------------------------------------------------------- #
def _pad_cin(cin, w):
    """Pad channel count so the packed lane width w*cin is a multiple of 128."""
    if (w * cin) % 128 == 0:
        return cin
    if 128 % w == 0:
        mult = 128 // w
        return ((cin + mult - 1) // mult) * mult
    return cin


def _pack_conv3x3(w_hwio, W):
    """(3,3,Cin,Cout) HWIO weight -> (3*W*Cin, W*Cout) packed block matrix.

    Row index  = dy*W*Cin + w_in*Cin + ci, Col index = w_out*Cout + co.
    Entry      = w[dy, w_in - w_out + 1, ci, co] when |w_in - w_out| <= 1, else 0.
    The missing out-of-range blocks implement the x-direction zero padding.
    """
    kh, kw, cin, cout = w_hwio.shape
    sel = np.zeros((kw, W, W), np.float32)              # sel[dx, w_in, w_out]
    for dx in range(kw):
        for wo in range(W):
            wi = wo + dx - 1
            if 0 <= wi < W:
                sel[dx, wi, wo] = 1.0
    big = jnp.einsum("dpw,ydic->ypiwc", jnp.asarray(sel), w_hwio)  # (3,W,Cin,W,Cout)
    return big.reshape(kh * W * cin, W * cout)


def _pack_conv1x1(wr, W):
    """(Cin, Cout) -> (W*Cin, W*Cout) block-diagonal matrix."""
    cin, cout = wr.shape
    big = jnp.einsum("pw,ic->piwc", jnp.eye(W, dtype=wr.dtype), wr)
    return big.reshape(W * cin, W * cout)


def pack_params(params, W):
    """Pack weights once into lane-dense bf16 MXU operands."""
    w1, b1, w2, b2, wr, br = (params[k] for k in ("w1", "b1", "w2", "b2", "wr", "br"))
    cin, cout = wr.shape
    cin_p = _pad_cin(cin, W)
    if cin_p != cin:                                    # structural zero channels
        w1 = jnp.pad(w1, ((0, 0), (0, 0), (0, cin_p - cin), (0, 0)))
        wr = jnp.pad(wr, ((0, cin_p - cin), (0, 0)))
    wco = W * cout

    w1p = _pack_conv3x3(w1, W)                          # (3*W*cin_p, wco)
    wrp = _pack_conv1x1(wr, W)                          # (W*cin_p,   wco)
    z = jnp.zeros((W * cin_p, wco), w1p.dtype)
    # Residual weight lives in the dy=1 (unshifted) block of the contraction.
    w1r = jnp.concatenate([w1p, jnp.concatenate([z, wrp, z], axis=0)], axis=1)
    w2p = _pack_conv3x3(w2, W)                          # (3*wco, wco)

    b1r = jnp.concatenate([jnp.tile(b1, W), jnp.tile(br, W)]).reshape(1, 2 * wco)
    b2r = jnp.tile(b2, W).reshape(1, wco)

    return {
        "w1r": w1r.astype(jnp.bfloat16),
        "b1r": b1r.astype(jnp.float32),
        "w2": w2p.astype(jnp.bfloat16),
        "b2": b2r.astype(jnp.float32),
    }


# --------------------------------------------------------------------------- #
# Forward wrapper
# --------------------------------------------------------------------------- #
def _pick_block_batch(n, h):
    """Images per grid step: fill ~128 MXU rows, but keep >=2 grid steps when
    possible so v7x's two TensorCores both get work (no-op on v5e/v6e)."""
    target = max(1, 128 // h)
    best = 1
    for nb in range(1, n + 1):
        if n % nb == 0 and nb <= target and (n // nb >= 2 or n == 1):
            best = nb
    return best


def residual_block_pallas(x_nhwc, packed):
    N, H, W, Cin = x_nhwc.shape
    w1r, b1r, w2, b2 = packed["w1r"], packed["b1r"], packed["w2"], packed["b2"]
    cin_p = w1r.shape[0] // (3 * W)
    wco = w2.shape[1]                                   # W * Cout
    cout = wco // W

    # channel-pad + lane-pack the activations (layout-free reshape of NHWC)
    if cin_p != Cin:
        x_nhwc = jnp.pad(x_nhwc, ((0, 0), (0, 0), (0, 0), (0, cin_p - Cin)))
    x2d = x_nhwc.reshape(N, H, W * cin_p)

    nb = _pick_block_batch(N, H)
    grid = (N // nb,)

    grid_spec = pltpu.PrefetchScalarGridSpec(
        num_scalar_prefetch=0,
        grid=grid,
        in_specs=[
            pl.BlockSpec((nb, H, W * cin_p), lambda b: (b, 0, 0)),
            pl.BlockSpec(w1r.shape, lambda b: (0, 0)),
            pl.BlockSpec(b1r.shape, lambda b: (0, 0)),
            pl.BlockSpec(w2.shape, lambda b: (0, 0)),
            pl.BlockSpec(b2.shape, lambda b: (0, 0)),
        ],
        out_specs=pl.BlockSpec((nb, H, wco), lambda b: (b, 0, 0)),
    )

    flops = 2 * N * H * (w1r.shape[0] * w1r.shape[1] + w2.shape[0] * w2.shape[1])
    bytes_accessed = (x2d.size * 4 + N * H * wco * 4
                      + (w1r.size + w2.size) * 2 + (b1r.size + b2.size) * 4)

    out2d = pl.pallas_call(
        resblock_kernel,
        out_shape=jax.ShapeDtypeStruct((N, H, wco), jnp.float32),
        grid_spec=grid_spec,
        compiler_params=pltpu.CompilerParams(
            dimension_semantics=("parallel",),          # batch independent -> v7x 2-TC
            # Guard: the packed weights are resident and double-buffered by the
            # BlockSpec pipeline; keep the scoped limit explicit (safe on v5e/v6e's
            # 128 MiB and under v7x's 64 MiB physical VMEM).  Large-W configs
            # should additionally tile the packed-weight K axis.
            vmem_limit_bytes=48 * 1024 * 1024,
        ),
        cost_estimate=pl.CostEstimate(flops=flops, transcendentals=0,
                                      bytes_accessed=bytes_accessed),
    )(x2d, w1r, b1r, w2, b2)

    return out2d.reshape(N, H, W, cout)


# --------------------------------------------------------------------------- #
# Pure-JAX reference and parameter init
# --------------------------------------------------------------------------- #
def residual_block_ref(x_nhwc, params):
    """Pure-JAX reference (matches PyTorch semantics, NHWC layout)."""
    dn = ("NHWC", "HWIO", "NHWC")
    conv = functools.partial(jax.lax.conv_general_dilated,
                             window_strides=(1, 1), dimension_numbers=dn)
    res = conv(x_nhwc, params["wr"].reshape(1, 1, *params["wr"].shape),
               padding="VALID") + params["br"]
    out = conv(x_nhwc, params["w1"], padding="SAME") + params["b1"]
    out = jnp.maximum(out, 0.0)
    out = conv(out, params["w2"], padding="SAME") + params["b2"]
    return jnp.maximum(out + res, 0.0)


def init_params(key, in_channels, out_channels):
    ks = jax.random.split(key, 6)
    s1 = 1.0 / np.sqrt(in_channels * 9)
    s2 = 1.0 / np.sqrt(out_channels * 9)
    sr = 1.0 / np.sqrt(in_channels)
    return {
        # weights stored HWIO (kh, kw, cin, cout)
        "w1": jax.random.uniform(ks[0], (3, 3, in_channels, out_channels),
                                 jnp.float32, -s1, s1),
        "b1": jax.random.uniform(ks[1], (out_channels,), jnp.float32, -s1, s1),
        "w2": jax.random.uniform(ks[2], (3, 3, out_channels, out_channels),
                                 jnp.float32, -s2, s2),
        "b2": jax.random.uniform(ks[3], (out_channels,), jnp.float32, -s2, s2),
        "wr": jax.random.uniform(ks[4], (in_channels, out_channels),
                                 jnp.float32, -sr, sr),
        "br": jax.random.uniform(ks[5], (out_channels,), jnp.float32, -sr, sr),
    }


if __name__ == "__main__":
    key = jax.random.PRNGKey(0)
    k_x, k_p = jax.random.split(key)

    N, Cin, H, W = 2, 4, 16, 16
    Cout = 8

    x_nchw = jax.random.normal(k_x, (N, Cin, H, W), jnp.float32)   # PyTorch layout
    params = init_params(k_p, Cin, Cout)

    x_nhwc = jnp.transpose(x_nchw, (0, 2, 3, 1))

    # One-time packing (hoisted out of the steady-state forward).
    packed = jax.tree_util.tree_map(jax.block_until_ready, pack_params(params, W))

    fwd = jax.jit(residual_block_pallas)
    out_nhwc = fwd(x_nhwc, packed)
    out_nchw = jnp.transpose(out_nhwc, (0, 3, 1, 2))                # back to PyTorch layout
    jax.block_until_ready(out_nchw)

    ref = jnp.transpose(residual_block_ref(x_nhwc, params), (0, 3, 1, 2))
    # Tolerance loosened vs. the all-f32 version: matmul operands are bf16
    # (accumulation stays f32), per the perf review.
    np.testing.assert_allclose(np.asarray(out_nchw), np.asarray(ref),
                               rtol=5e-2, atol=5e-2)
    print("KERNEL_OK")
</pallas_src>

<mosaic_0001>
module attributes {stable_mosaic.version = 11 : i64} {
  func.func @resblock_kernel(%arg0: i32, %arg1: memref<1x16x128xf32, #tpu.memory_space<vmem>>, %arg2: memref<384x256xbf16, #tpu.memory_space<vmem>>, %arg3: memref<1x256xf32, #tpu.memory_space<vmem>>, %arg4: memref<384x128xbf16, #tpu.memory_space<vmem>>, %arg5: memref<1x128xf32, #tpu.memory_space<vmem>>, %arg6: memref<1x16x128xf32, #tpu.memory_space<vmem>>) attributes {dimension_semantics = [#tpu.dimension_semantics<parallel>], iteration_bounds = array<i64: 2>, scalar_prefetch = 0 : i64, scratch_operands = 0 : i64, tpu.core_type = #tpu.core_type<tc>, window_params = [{transform_indices = @transform_0, window_bounds = array<i64: 1, 16, 128>}, {pipeline_mode = #tpu.pipeline_mode<synchronous>, transform_indices = @transform_1, window_bounds = array<i64: 384, 256>}, {pipeline_mode = #tpu.pipeline_mode<synchronous>, transform_indices = @transform_2, window_bounds = array<i64: 1, 256>}, {pipeline_mode = #tpu.pipeline_mode<synchronous>, transform_indices = @transform_3, window_bounds = array<i64: 384, 128>}, {pipeline_mode = #tpu.pipeline_mode<synchronous>, transform_indices = @transform_4, window_bounds = array<i64: 1, 128>}, {transform_indices = @transform_5, window_bounds = array<i64: 1, 16, 128>}]} {
    %c0 = arith.constant 0 : index
    %c0_0 = arith.constant 0 : index
    %c0_1 = arith.constant 0 : index
    %0 = vector.load %arg1[%c0, %c0_0, %c0_1] : memref<1x16x128xf32, #tpu.memory_space<vmem>>, vector<1x16x128xf32>
    %1 = vector.shape_cast %0 : vector<1x16x128xf32> to vector<16x128xf32>
    %2 = tpu.iota {dimensions = array<i32: 0>} : vector<16x128xi32>
    %cst = arith.constant 0.000000e+00 : f32
    %3 = vector.broadcast %cst : f32 to vector<16x128xf32>
    %c16_i32 = arith.constant 16 : i32
    %c0_i32 = arith.constant 0 : i32
    %4 = arith.cmpi eq, %c16_i32, %c0_i32 : i32
    %c1_i32 = arith.constant 1 : i32
    %5 = arith.select %4, %c1_i32, %c16_i32 : i32
    %6 = vector.broadcast %5 : i32 to vector<16x128xi32>
    %7 = arith.remsi %2, %6 : vector<16x128xi32>
    %c0_i32_2 = arith.constant 0 : i32
    %8 = vector.broadcast %c0_i32_2 : i32 to vector<16x128xi32>
    %9 = arith.cmpi ne, %7, %8 : vector<16x128xi32>
    %c0_i32_3 = arith.constant 0 : i32
    %10 = vector.broadcast %c0_i32_3 : i32 to vector<16x128xi32>
    %11 = arith.cmpi slt, %7, %10 : vector<16x128xi32>
    %c0_i32_4 = arith.constant 0 : i32
    %12 = arith.cmpi slt, %5, %c0_i32_4 : i32
    %13 = vector.broadcast %12 : i1 to vector<16x128xi1>
    %14 = vector.broadcast %13 : vector<16x128xi1> to vector<16x128xi1>
    %15 = arith.xori %11, %14 : vector<16x128xi1>
    %16 = arith.andi %15, %9 : vector<16x128xi1>
    %17 = vector.broadcast %5 : i32 to vector<16x128xi32>
    %18 = arith.addi %7, %17 : vector<16x128xi32>
    %19 = arith.select %16, %18, %7 : vector<16x128xi1>, vector<16x128xi32>
    %c0_i32_5 = arith.constant 0 : i32
    %20 = vector.broadcast %c0_i32_5 : i32 to vector<16x128xi32>
    %21 = arith.cmpi eq, %19, %20 : vector<16x128xi32>
    %c1_i32_6 = arith.constant 1 : i32
    %22 = tpu.dynamic_rotate %1 by %c1_i32_6 dim 0 : vector<16x128xf32>, i32 -> vector<16x128xf32>
    %23 = arith.select %21, %3, %22 : vector<16x128xi1>, vector<16x128xf32>
    %c16_i32_7 = arith.constant 16 : i32
    %c0_i32_8 = arith.constant 0 : i32
    %24 = arith.cmpi eq, %c16_i32_7, %c0_i32_8 : i32
    %c1_i32_9 = arith.constant 1 : i32
    %25 = arith.select %24, %c1_i32_9, %c16_i32_7 : i32
    %26 = vector.broadcast %25 : i32 to vector<16x128xi32>
    %27 = arith.remsi %2, %26 : vector<16x128xi32>
    %c0_i32_10 = arith.constant 0 : i32
    %28 = vector.broadcast %c0_i32_10 : i32 to vector<16x128xi32>
    %29 = arith.cmpi ne, %27, %28 : vector<16x128xi32>
    %c0_i32_11 = arith.constant 0 : i32
    %30 = vector.broadcast %c0_i32_11 : i32 to vector<16x128xi32>
    %31 = arith.cmpi slt, %27, %30 : vector<16x128xi32>
    %c0_i32_12 = arith.constant 0 : i32
    %32 = arith.cmpi slt, %25, %c0_i32_12 : i32
    %33 = vector.broadcast %32 : i1 to vector<16x128xi1>
    %34 = vector.broadcast %33 : vector<16x128xi1> to vector<16x128xi1>
    %35 = arith.xori %31, %34 : vector<16x128xi1>
    %36 = arith.andi %35, %29 : vector<16x128xi1>
    %37 = vector.broadcast %25 : i32 to vector<16x128xi32>
    %38 = arith.addi %27, %37 : vector<16x128xi32>
    %39 = arith.select %36, %38, %27 : vector<16x128xi1>, vector<16x128xi32>
    %c15_i32 = arith.constant 15 : i32
    %40 = vector.broadcast %c15_i32 : i32 to vector<16x128xi32>
    %41 = arith.cmpi eq, %39, %40 : vector<16x128xi32>
    %c15_i32_13 = arith.constant 15 : i32
    %42 = tpu.dynamic_rotate %1 by %c15_i32_13 dim 0 : vector<16x128xf32>, i32 -> vector<16x128xf32>
    %43 = arith.select %41, %3, %42 : vector<16x128xi1>, vector<16x128xf32>
    %44 = tpu.concatenate %23, %1, %43 in 1 : vector<16x128xf32>, vector<16x128xf32>, vector<16x128xf32> -> vector<16x384xf32>
    %45 = arith.truncf %44 : vector<16x384xf32> to vector<16x384xbf16>
    %c0_14 = arith.constant 0 : index
    %c0_15 = arith.constant 0 : index
    %46 = vector.load %arg2[%c0_14, %c0_15] : memref<384x256xbf16, #tpu.memory_space<vmem>>, vector<384x256xbf16>
    %cst_16 = arith.constant dense<0.000000e+00> : vector<16x256xf32>
    %47 = tpu.matmul %45, %46, %cst_16 {dimension_numbers = #tpu.dot_dimension_numbers<[1], [0], [0], [1], [0, 0, 1, 1], [], []>} : vector<16x384xbf16>, vector<384x256xbf16>, vector<16x256xf32> -> vector<16x256xf32>
    %c0_17 = arith.constant 0 : index
    %c0_18 = arith.constant 0 : index
    %48 = vector.load %arg3[%c0_17, %c0_18] : memref<1x256xf32, #tpu.memory_space<vmem>>, vector<1x256xf32>
    %49 = vector.broadcast %48 : vector<1x256xf32> to vector<16x256xf32>
    %50 = arith.addf %47, %49 : vector<16x256xf32>
    %51 = vector.extract_strided_slice %50 {offsets = [0, 0], sizes = [16, 128], strides = [1, 1]} : vector<16x256xf32> to vector<16x128xf32>
    %cst_19 = arith.constant 0.000000e+00 : f32
    %52 = vector.broadcast %cst_19 : f32 to vector<16x128xf32>
    %53 = arith.maximumf %51, %52 : vector<16x128xf32>
    %54 = vector.extract_strided_slice %50 {offsets = [0, 128], sizes = [16, 128], strides = [1, 1]} : vector<16x256xf32> to vector<16x128xf32>
    %55 = tpu.iota {dimensions = array<i32: 0>} : vector<16x128xi32>
    %cst_20 = arith.constant 0.000000e+00 : f32
    %56 = vector.broadcast %cst_20 : f32 to vector<16x128xf32>
    %c16_i32_21 = arith.constant 16 : i32
    %c0_i32_22 = arith.constant 0 : i32
    %57 = arith.cmpi eq, %c16_i32_21, %c0_i32_22 : i32
    %c1_i32_23 = arith.constant 1 : i32
    %58 = arith.select %57, %c1_i32_23, %c16_i32_21 : i32
    %59 = vector.broadcast %58 : i32 to vector<16x128xi32>
    %60 = arith.remsi %55, %59 : vector<16x128xi32>
    %c0_i32_24 = arith.constant 0 : i32
    %61 = vector.broadcast %c0_i32_24 : i32 to vector<16x128xi32>
    %62 = arith.cmpi ne, %60, %61 : vector<16x128xi32>
    %c0_i32_25 = arith.constant 0 : i32
    %63 = vector.broadcast %c0_i32_25 : i32 to vector<16x128xi32>
    %64 = arith.cmpi slt, %60, %63 : vector<16x128xi32>
    %c0_i32_26 = arith.constant 0 : i32
    %65 = arith.cmpi slt, %58, %c0_i32_26 : i32
    %66 = vector.broadcast %65 : i1 to vector<16x128xi1>
    %67 = vector.broadcast %66 : vector<16x128xi1> to vector<16x128xi1>
    %68 = arith.xori %64, %67 : vector<16x128xi1>
    %69 = arith.andi %68, %62 : vector<16x128xi1>
    %70 = vector.broadcast %58 : i32 to vector<16x128xi32>
    %71 = arith.addi %60, %70 : vector<16x128xi32>
    %72 = arith.select %69, %71, %60 : vector<16x128xi1>, vector<16x128xi32>
    %c0_i32_27 = arith.constant 0 : i32
    %73 = vector.broadcast %c0_i32_27 : i32 to vector<16x128xi32>
    %74 = arith.cmpi eq, %72, %73 : vector<16x128xi32>
    %c1_i32_28 = arith.constant 1 : i32
    %75 = tpu.dynamic_rotate %53 by %c1_i32_28 dim 0 : vector<16x128xf32>, i32 -> vector<16x128xf32>
    %76 = arith.select %74, %56, %75 : vector<16x128xi1>, vector<16x128xf32>
    %c16_i32_29 = arith.constant 16 : i32
    %c0_i32_30 = arith.constant 0 : i32
    %77 = arith.cmpi eq, %c16_i32_29, %c0_i32_30 : i32
    %c1_i32_31 = arith.constant 1 : i32
    %78 = arith.select %77, %c1_i32_31, %c16_i32_29 : i32
    %79 = vector.broadcast %78 : i32 to vector<16x128xi32>
    %80 = arith.remsi %55, %79 : vector<16x128xi32>
    %c0_i32_32 = arith.constant 0 : i32
    %81 = vector.broadcast %c0_i32_32 : i32 to vector<16x128xi32>
    %82 = arith.cmpi ne, %80, %81 : vector<16x128xi32>
    %c0_i32_33 = arith.constant 0 : i32
    %83 = vector.broadcast %c0_i32_33 : i32 to vector<16x128xi32>
    %84 = arith.cmpi slt, %80, %83 : vector<16x128xi32>
    %c0_i32_34 = arith.constant 0 : i32
    %85 = arith.cmpi slt, %78, %c0_i32_34 : i32
    %86 = vector.broadcast %85 : i1 to vector<16x128xi1>
    %87 = vector.broadcast %86 : vector<16x128xi1> to vector<16x128xi1>
    %88 = arith.xori %84, %87 : vector<16x128xi1>
    %89 = arith.andi %88, %82 : vector<16x128xi1>
    %90 = vector.broadcast %78 : i32 to vector<16x128xi32>
    %91 = arith.addi %80, %90 : vector<16x128xi32>
    %92 = arith.select %89, %91, %80 : vector<16x128xi1>, vector<16x128xi32>
    %c15_i32_35 = arith.constant 15 : i32
    %93 = vector.broadcast %c15_i32_35 : i32 to vector<16x128xi32>
    %94 = arith.cmpi eq, %92, %93 : vector<16x128xi32>
    %c15_i32_36 = arith.constant 15 : i32
    %95 = tpu.dynamic_rotate %53 by %c15_i32_36 dim 0 : vector<16x128xf32>, i32 -> vector<16x128xf32>
    %96 = arith.select %94, %56, %95 : vector<16x128xi1>, vector<16x128xf32>
    %97 = tpu.concatenate %76, %53, %96 in 1 : vector<16x128xf32>, vector<16x128xf32>, vector<16x128xf32> -> vector<16x384xf32>
    %98 = arith.truncf %97 : vector<16x384xf32> to vector<16x384xbf16>
    %c0_37 = arith.constant 0 : index
    %c0_38 = arith.constant 0 : index
    %99 = vector.load %arg4[%c0_37, %c0_38] : memref<384x128xbf16, #tpu.memory_space<vmem>>, vector<384x128xbf16>
    %cst_39 = arith.constant dense<0.000000e+00> : vector<16x128xf32>
    %100 = tpu.matmul %98, %99, %cst_39 {dimension_numbers = #tpu.dot_dimension_numbers<[1], [0], [0], [1], [0, 0, 1, 1], [], []>} : vector<16x384xbf16>, vector<384x128xbf16>, vector<16x128xf32> -> vector<16x128xf32>
    %c0_40 = arith.constant 0 : index
    %c0_41 = arith.constant 0 : index
    %101 = vector.load %arg5[%c0_40, %c0_41] : memref<1x128xf32, #tpu.memory_space<vmem>>, vector<1x128xf32>
    %102 = vector.broadcast %101 : vector<1x128xf32> to vector<16x128xf32>
    %103 = arith.addf %100, %102 : vector<16x128xf32>
    %104 = arith.addf %103, %54 : vector<16x128xf32>
    %cst_42 = arith.constant 0.000000e+00 : f32
    %105 = vector.broadcast %cst_42 : f32 to vector<16x128xf32>
    %106 = arith.maximumf %104, %105 : vector<16x128xf32>
    %107 = vector.shape_cast %106 : vector<16x128xf32> to vector<1x16x128xf32>
    %c0_43 = arith.constant 0 : index
    %c0_44 = arith.constant 0 : index
    %c0_45 = arith.constant 0 : index
    %108 = vector.load %arg6[%c0_43, %c0_44, %c0_45] : memref<1x16x128xf32, #tpu.memory_space<vmem>>, vector<1x16x128xf32>
    tpu.vector_store %arg6[%c0_43, %c0_44, %c0_45], %107 {strides = array<i32>} : memref<1x16x128xf32, #tpu.memory_space<vmem>>, vector<1x16x128xf32>,
    return
  }
  func.func @transform_0(%arg0: i32) -> (i32, i32, i32) {
    %c0_i32 = arith.constant 0 : i32
    %c0_i32_0 = arith.constant 0 : i32
    %c0_i32_1 = arith.constant 0 : i32
    return %arg0, %c0_i32, %c0_i32_0 : i32, i32, i32
  }
  func.func @transform_1(%arg0: i32) -> (i32, i32) {
    %c0_i32 = arith.constant 0 : i32
    %c0_i32_0 = arith.constant 0 : i32
    %c0_i32_1 = arith.constant 0 : i32
    return %c0_i32, %c0_i32_0 : i32, i32
  }
  func.func @transform_2(%arg0: i32) -> (i32, i32) {
    %c0_i32 = arith.constant 0 : i32
    %c0_i32_0 = arith.constant 0 : i32
    %c0_i32_1 = arith.constant 0 : i32
    return %c0_i32, %c0_i32_0 : i32, i32
  }
  func.func @transform_3(%arg0: i32) -> (i32, i32) {
    %c0_i32 = arith.constant 0 : i32
    %c0_i32_0 = arith.constant 0 : i32
    %c0_i32_1 = arith.constant 0 : i32
    return %c0_i32, %c0_i32_0 : i32, i32
  }
  func.func @transform_4(%arg0: i32) -> (i32, i32) {
    %c0_i32 = arith.constant 0 : i32
    %c0_i32_0 = arith.constant 0 : i32
    %c0_i32_1 = arith.constant 0 : i32
    return %c0_i32, %c0_i32_0 : i32, i32
  }
  func.func @transform_5(%arg0: i32) -> (i32, i32, i32) {
    %c0_i32 = arith.constant 0 : i32
    %c0_i32_0 = arith.constant 0 : i32
    %c0_i32_1 = arith.constant 0 : i32
    return %arg0, %c0_i32, %c0_i32_0 : i32, i32, i32
  }
}

</mosaic_0001>

<llo_original>
// kernel: residual_block_pallas.1
$region0: #{residual_block_pallas.1}
  #allocation0 [shape = 'u32[]', space=smem, size = 0x4, offset = 0x4, fixed_abs, tag = 'smem constant byte address 0x4 - core index']
  #allocation1 [shape = 'u32[72,128]{1,0:T(1,128)}', space=vmem, size = 0x9000, scoped, tag = 'internal scratch']
  %s0 = inlined_call_operand.vmem [shape: f32[2,16,128], index: 0, kind: input, shape index: {}]
  %s1 = inlined_call_operand.vmem [shape: bf16[384,256], index: 1, kind: input, shape index: {}]
  %s2 = inlined_call_operand.vmem [shape: f32[1,256], index: 2, kind: input, shape index: {}]
  %s3 = inlined_call_operand.vmem [shape: bf16[384,128], index: 3, kind: input, shape index: {}]
  %s4 = inlined_call_operand.vmem [shape: f32[1,128], index: 4, kind: input, shape index: {}]
  %s5 = inlined_call_operand.vmem [shape: f32[2,16,128], index: 5, kind: output, shape index: {}]
  %s6 = sld [smem:[#allocation0]]
  $region53: #{residual_block_pallas.1} parent=0
    _
  %s8 = ssub.s32 1, %s6
  %s9 = scalar_select 0, %s8, %s6
  loop: start=0, step=1, limit=4
  $region2: #{residual_block_pallas.1} parent=0 // loop_pre_header
    _
  $region3: #{residual_block_pallas.1} parent=0 // loop_header
    %s11 = sphi 0, %s15
    %p12 = scmp.ge.s32.totalorder %s11, 4
    %s21 = sphi 0, %s23
    %s24 = sphi 0, %s21
    %s25 = sphi 0, %s24
    %s41 = sphi 0, %s25
    %s45 = sphi 0, %s45
    %s47 = sphi 0, %s45
    %s48 = sphi 0, %s47
    %s62 = sphi 0, %s48
    %s66 = sphi 0, %s66
    %s68 = sphi 0, %s66
    %s69 = sphi 0, %s68
    %s83 = sphi 0, %s69
    %s87 = sphi 0, %s87
    %s89 = sphi 0, %s87
    %s90 = sphi 0, %s89
    %s104 = sphi 0, %s90
    %s108 = sphi 0, %s108
    %s110 = sphi 0, %s108
    %s111 = sphi 0, %s110
    %s125 = sphi 0, %s111
    %s131 = sphi 0, %s133
    %s134 = sphi 0, %s131
    %s135 = sphi 0, %s134
    %s151 = sphi 0, %s135
  $region4: #{residual_block_pallas.1} parent=0 // loop_header_branch
    %14 = sbr.rel (%p12) target = $region8
  $region5: #{residual_block_pallas.1} parent=0 // loop_body
    %s16 = ssub.s32 %s11, 1
    %s17 = ssub.s32 %s11, 2
    %s18 = sadd.s32 %s11, 1
    %s19 = ssub.s32 %s11, %s18
    %p20 = scmp.eq.s32.totalorder %s19, 0
    %s22 = sadd.s32 %s21, 1
    %s23 = scalar_select %p20, %s21, %s22
    %p26 = pneg %p20
    %p27 = scmp.eq.s32.totalorder %s11, 1
    %p28 = por %p26, %p27
    %p29 = scmp.ne.s32.totalorder %s21, %s24
    %p30 = scmp.eq.s32.totalorder %s11, 0
    %p31 = por %p29, %p30
    %p32 = scmp.ne.s32.totalorder %s21, %s24
    %p33 = scmp.eq.s32.totalorder %s16, 1
    %p34 = por %p32, %p33
    %p35 = scmp.ne.s32.totalorder %s24, %s25
    %p36 = scmp.eq.s32.totalorder %s16, 0
    %p37 = por %p35, %p36
    %p38 = scmp.ne.s32.totalorder %s24, %s25
    %p39 = scmp.eq.s32.totalorder %s17, 1
    %p40 = por %p38, %p39
    %p42 = scmp.ne.s32.totalorder %s25, %s41
    %p43 = scmp.eq.s32.totalorder %s17, 0
    %p44 = por %p42, %p43
    %s46 = sadd.s32 %s45, 1
    %p49 = scmp.eq.s32.totalorder %s11, 1
    %p50 = scmp.ne.s32.totalorder %s45, %s47
    %p51 = scmp.eq.s32.totalorder %s11, 0
    %p52 = por %p50, %p51
    %p53 = scmp.ne.s32.totalorder %s45, %s47
    %p54 = scmp.eq.s32.totalorder %s16, 1
    %p55 = por %p53, %p54
    %p56 = scmp.ne.s32.totalorder %s47, %s48
    %p57 = scmp.eq.s32.totalorder %s16, 0
    %p58 = por %p56, %p57
    %p59 = scmp.ne.s32.totalorder %s47, %s48
    %p60 = scmp.eq.s32.totalorder %s17, 1
    %p61 = por %p59, %p60
    %p63 = scmp.ne.s32.totalorder %s48, %s62
    %p64 = scmp.eq.s32.totalorder %s17, 0
    %p65 = por %p63, %p64
    %s67 = sadd.s32 %s66, 1
    %p70 = scmp.eq.s32.totalorder %s11, 1
    %p71 = scmp.ne.s32.totalorder %s66, %s68
    %p72 = scmp.eq.s32.totalorder %s11, 0
    %p73 = por %p71, %p72
    %p74 = scmp.ne.s32.totalorder %s66, %s68
    %p75 = scmp.eq.s32.totalorder %s16, 1
    %p76 = por %p74, %p75
    %p77 = scmp.ne.s32.totalorder %s68, %s69
    %p78 = scmp.eq.s32.totalorder %s16, 0
    %p79 = por %p77, %p78
    %p80 = scmp.ne.s32.totalorder %s68, %s69
    %p81 = scmp.eq.s32.totalorder %s17, 1
    %p82 = por %p80, %p81
    %p84 = scmp.ne.s32.totalorder %s69, %s83
    %p85 = scmp.eq.s32.totalorder %s17, 0
    %p86 = por %p84, %p85
    %s88 = sadd.s32 %s87, 1
    %p91 = scmp.eq.s32.totalorder %s11, 1
    %p92 = scmp.ne.s32.totalorder %s87, %s89
    %p93 = scmp.eq.s32.totalorder %s11, 0
    %p94 = por %p92, %p93
    %p95 = scmp.ne.s32.totalorder %s87, %s89
    %p96 = scmp.eq.s32.totalorder %s16, 1
    %p97 = por %p95, %p96
    %p98 = scmp.ne.s32.totalorder %s89, %s90
    %p99 = scmp.eq.s32.totalorder %s16, 0
    %p100 = por %p98, %p99
    %p101 = scmp.ne.s32.totalorder %s89, %s90
    %p102 = scmp.eq.s32.totalorder %s17, 1
    %p103 = por %p101, %p102
    %p105 = scmp.ne.s32.totalorder %s90, %s104
    %p106 = scmp.eq.s32.totalorder %s17, 0
    %p107 = por %p105, %p106
    %s109 = sadd.s32 %s108, 1
    %p112 = scmp.eq.s32.totalorder %s11, 1
    %p113 = scmp.ne.s32.totalorder %s108, %s110
    %p114 = scmp.eq.s32.totalorder %s11, 0
    %p115 = por %p113, %p114
    %p116 = scmp.ne.s32.totalorder %s108, %s110
    %p117 = scmp.eq.s32.totalorder %s16, 1
    %p118 = por %p116, %p117
    %p119 = scmp.ne.s32.totalorder %s110, %s111
    %p120 = scmp.eq.s32.totalorder %s16, 0
    %p121 = por %p119, %p120
    %p122 = scmp.ne.s32.totalorder %s110, %s111
    %p123 = scmp.eq.s32.totalorder %s17, 1
    %p124 = por %p122, %p123
    %p126 = scmp.ne.s32.totalorder %s111, %s125
    %p127 = scmp.eq.s32.totalorder %s17, 0
    %p128 = por %p126, %p127
    %s129 = ssub.s32 %s11, %s18
    %p130 = scmp.eq.s32.totalorder %s129, 0
    %s132 = sadd.s32 %s131, 1
    %s133 = scalar_select %p130, %s131, %s132
    %p136 = pneg %p130
    %p137 = scmp.eq.s32.totalorder %s11, 1
    %p138 = por %p136, %p137
    %p139 = scmp.ne.s32.totalorder %s131, %s134
    %p140 = scmp.eq.s32.totalorder %s11, 0
    %p141 = por %p139, %p140
    %p142 = scmp.ne.s32.totalorder %s131, %s134
    %p143 = scmp.eq.s32.totalorder %s16, 1
    %p144 = por %p142, %p143
    %p145 = scmp.ne.s32.totalorder %s134, %s135
    %p146 = scmp.eq.s32.totalorder %s16, 0
    %p147 = por %p145, %p146
    %p148 = scmp.ne.s32.totalorder %s134, %s135
    %p149 = scmp.eq.s32.totalorder %s17, 1
    %p150 = por %p148, %p149
    %p152 = scmp.ne.s32.totalorder %s135, %s151
    %p153 = scmp.eq.s32.totalorder %s17, 0
    %p154 = por %p152, %p153
    %p155 = scmp.le.s32.totalorder 1, %s11
    %p156 = scmp.lt.s32.totalorder %s11, 3
    %p157 = pnand %p155, %p156
    %p158 = pneg %p157
    // Predicated region
    $region9: #{residual_block_pallas.1} parent=5 // pred_check
      _
    $region10: #{residual_block_pallas.1} parent=5 // pred_check_branch
      %160 = sbr.rel (%p157) target = $region12
    $region11: #{residual_block_pallas.1} parent=5 // pred_region
      %s161 = ssub.s32 %s11, 1
      // Predicated region
      $region13: #{residual_block_pallas.1} parent=11 // pred_check
        %p162 = pneg %p58
      $region14: #{residual_block_pallas.1} parent=11 // pred_check_branch
        %164 = sbr.rel (%p162) target = $region16
      $region15: #{residual_block_pallas.1} parent=11 // pred_region
        _
      $region16: #{residual_block_pallas.1} parent=11 // pred_fallthru
        _
      // Predicated region
      $region17: #{residual_block_pallas.1} parent=11 // pred_check
        %p165 = pneg %p79
      $region18: #{residual_block_pallas.1} parent=11 // pred_check_branch
        %167 = sbr.rel (%p165) target = $region20
      $region19: #{residual_block_pallas.1} parent=11 // pred_region
        _
      $region20: #{residual_block_pallas.1} parent=11 // pred_fallthru
        _
      // Predicated region
      $region21: #{residual_block_pallas.1} parent=11 // pred_check
        %p168 = pneg %p100
      $region22: #{residual_block_pallas.1} parent=11 // pred_check_branch
        %170 = sbr.rel (%p168) target = $region24
      $region23: #{residual_block_pallas.1} parent=11 // pred_region
        _
      $region24: #{residual_block_pallas.1} parent=11 // pred_fallthru
        _
      // Predicated region
      $region25: #{residual_block_pallas.1} parent=11 // pred_check
        %p171 = pneg %p121
      $region26: #{residual_block_pallas.1} parent=11 // pred_check_branch
        %173 = sbr.rel (%p171) target = $region28
      $region27: #{residual_block_pallas.1} parent=11 // pred_region
        _
      $region28: #{residual_block_pallas.1} parent=11 // pred_fallthru
        _
    $region12: #{residual_block_pallas.1} parent=5 // pred_fallthru
      _
    %p174 = scmp.lt.s32.totalorder %s11, 2
    // Predicated region
    $region29: #{residual_block_pallas.1} parent=5 // pred_check
      %p175 = pneg %p174
    $region30: #{residual_block_pallas.1} parent=5 // pred_check_branch
      %177 = sbr.rel (%p175) target = $region32
    $region31: #{residual_block_pallas.1} parent=5 // pred_region
      // Predicated region
      $region33: #{residual_block_pallas.1} parent=31 // pred_check
        %p178 = pneg %p31
      $region34: #{residual_block_pallas.1} parent=31 // pred_check_branch
        %180 = sbr.rel (%p178) target = $region36
      $region35: #{residual_block_pallas.1} parent=31 // pred_region
        %p181 = scmp.lt.s32.totalorder %s11, 1
        %s182 = scalar_select %p181, %s11, 1
        %s183 = smul.addr %s182, 2
        %s184 = smul.addr %s183, 8
        %s185 = scalar_lea.vmem %s0, %s184
      $region36: #{residual_block_pallas.1} parent=31 // pred_fallthru
        _
    $region32: #{residual_block_pallas.1} parent=5 // pred_fallthru
      _
    %p186 = scmp.le.s32.totalorder 1, %s11
    %p187 = scmp.lt.s32.totalorder %s11, 3
    %p188 = pnand %p186, %p187
    %p189 = pneg %p188
    // Predicated region
    $region37: #{residual_block_pallas.1} parent=5 // pred_check
      _
    $region38: #{residual_block_pallas.1} parent=5 // pred_check_branch
      %191 = sbr.rel (%p188) target = $region40
    $region39: #{residual_block_pallas.1} parent=5 // pred_region
      %s192 = ssub.s32 %s11, 1
      %p193 = scmp.lt.s32.totalorder %s16, 1
      %s194 = scalar_select %p193, %s16, 1
      %s195 = smul.addr %s194, 2
      %s196 = smul.addr %s195, 8
      %s197 = scalar_lea.vmem %s0, %s196
      %p198 = pneg %p37
      %p199 = pneg %p34
      %p200 = pneg %p58
      %p201 = pneg %p55
      %p202 = pneg %p79
      %p203 = pneg %p76
      %p204 = pneg %p100
      %p205 = pneg %p97
      %p206 = pneg %p121
      %p207 = pneg %p118
      %p208 = pneg %p147
      %p209 = pneg %p144
      %p210 = scmp.lt.s32.totalorder %s16, 1
      %s211 = scalar_select %p210, %s16, 1
      %s212 = smul.addr %s211, 2
      %s213 = smul.addr %s212, 8
      %s214 = scalar_lea.vmem %s5, %s213
      %p215 = scmp.lt.s32.totalorder %s16, 1
      %s216 = scalar_select %p215, %s16, 1
      %s217 = smul.addr %s216, 2
      %s218 = smul.addr %s217, 8
      %s219 = scalar_lea.vmem %s0, %s218
      %p220 = scmp.lt.s32.totalorder %s16, 1
      %s221 = scalar_select %p220, %s16, 1
      %s222 = smul.addr %s221, 2
      %s223 = smul.addr %s222, 8
      %s224 = scalar_lea.vmem %s5, %s223
      %v225 = vld [vmem:[%s219] sm:$0xff]
      %v226 = vld [vmem:[%s219 + $0x8] sm:$0xff]
      %v227 = vlaneseq
      %v228 = vshrl.u32 %v227, 7
      %v229 = vadd.s32 %v228, 8
      %vm230 = vcmp.lt.s32.totalorder %v228, 0
      %v231 = vsub.s32 0, %v228
      %v232 = vsel %vm230, %v231, %v228
      %v233 = vshrl.u32 %v232, 4
      %v234 = vand.u32 %v232, 15
      %v235 = vsub.s32 0, %v234
      %v236 = vsel %vm230, %v235, %v234
      %vm237 = vcmp.lt.s32.totalorder %v229, 0
      %v238 = vsub.s32 0, %v229
      %v239 = vsel %vm237, %v238, %v229
      %v240 = vshrl.u32 %v239, 4
      %v241 = vand.u32 %v239, 15
      %v242 = vsub.s32 0, %v241
      %v243 = vsel %vm237, %v242, %v241
      %vm244 = vcmp.ne.s32.totalorder %v236, 0
      %vm245 = vcmp.ne.s32.totalorder %v243, 0
      %vm246 = vcmp.lt.s32.totalorder %v236, 0
      %vm247 = vcmp.lt.s32.totalorder %v243, 0
      %vm248 = vmand %vm246, %vm244
      %vm249 = vmand %vm247, %vm245
      %v250 = vadd.s32 %v236, 16
      %v251 = vadd.s32 %v243, 16
      %v252 = vsel %vm248, %v250, %v236
      %v253 = vsel %vm249, %v251, %v243
      %vm254 = vcmp.eq.s32.totalorder %v252, 0
      %vm255 = vcmp.eq.s32.totalorder %v253, 0
      %v256 = vrot.slane %v225, 7
      %v257 = vrot.slane %v226, 7
      %vm258 = vcmp.lt.s32.totalorder %v228, 1
      %v259 = vsel %vm258, %v256, %v257
      %v260 = vsel %vm258, %v257, %v256
      %v261 = vsel %vm254, 0.0, %v260
      %v262 = vsel %vm255, 0.0, %v259
      %vm263 = vcmp.eq.s32.totalorder %v252, 15
      %vm264 = vcmp.eq.s32.totalorder %v253, 15
      %v265 = vrot.slane %v225, 1
      %v266 = vrot.slane %v226, 1
      %vm267 = vcmp.lt.s32.totalorder %v228, 7
      %v268 = vsel %vm267, %v265, %v266
      %v269 = vsel %vm267, %v266, %v265
      %v270 = vsel %vm263, 0.0, %v268
      %v271 = vsel %vm264, 0.0, %v269
      %v272 = vpack.c.bf16 %v262, %v261
      %v273 = vpack.c.bf16 %v226, %v225
      %v274 = vpack.c.bf16 %v271, %v270
      %v275 = vld [vmem:[%s1] sm:$0xff]
      %v276 = vld [vmem:[%s1 + $0x8] sm:$0xff]
      %v277 = vld [vmem:[%s1 + $0x10] sm:$0xff]
      %v278 = vld [vmem:[%s1 + $0x18] sm:$0xff]
      %v279 = vld [vmem:[%s1 + $0x20] sm:$0xff]
      %v280 = vld [vmem:[%s1 + $0x28] sm:$0xff]
      %v281 = vld [vmem:[%s1 + $0x30] sm:$0xff]
      %v282 = vld [vmem:[%s1 + $0x38] sm:$0xff]
      %v283 = vld [vmem:[%s1 + $0x40] sm:$0xff]
      %v284 = vld [vmem:[%s1 + $0x48] sm:$0xff]
      %v285 = vld [vmem:[%s1 + $0x50] sm:$0xff]
      %v286 = vld [vmem:[%s1 + $0x58] sm:$0xff]
      %v287 = vld [vmem:[%s1 + $0x60] sm:$0xff]
      %v288 = vld [vmem:[%s1 + $0x68] sm:$0xff]
      %v289 = vld [vmem:[%s1 + $0x70] sm:$0xff]
      %v290 = vld [vmem:[%s1 + $0x78] sm:$0xff]
      %v291 = vld [vmem:[%s1 + $0x80] sm:$0xff]
      %v292 = vld [vmem:[%s1 + $0x88] sm:$0xff]
      %v293 = vld [vmem:[%s1 + $0x90] sm:$0xff]
      %v294 = vld [vmem:[%s1 + $0x98] sm:$0xff]
      %v295 = vld [vmem:[%s1 + $0xa0] sm:$0xff]
      %v296 = vld [vmem:[%s1 + $0xa8] sm:$0xff]
      %v297 = vld [vmem:[%s1 + $0xb0] sm:$0xff]
      %v298 = vld [vmem:[%s1 + $0xb8] sm:$0xff]
      %v299 = vld [vmem:[%s1 + $0xc0] sm:$0xff]
      %v300 = vld [vmem:[%s1 + $0xc8] sm:$0xff]
      %v301 = vld [vmem:[%s1 + $0xd0] sm:$0xff]
      %v302 = vld [vmem:[%s1 + $0xd8] sm:$0xff]
      %v303 = vld [vmem:[%s1 + $0xe0] sm:$0xff]
      %v304 = vld [vmem:[%s1 + $0xe8] sm:$0xff]
      %v305 = vld [vmem:[%s1 + $0xf0] sm:$0xff]
      %v306 = vld [vmem:[%s1 + $0xf8] sm:$0xff]
      %v307 = vld [vmem:[%s1 + $0x100] sm:$0xff]
      %v308 = vld [vmem:[%s1 + $0x108] sm:$0xff]
      %v309 = vld [vmem:[%s1 + $0x110] sm:$0xff]
      %v310 = vld [vmem:[%s1 + $0x118] sm:$0xff]
      %v311 = vld [vmem:[%s1 + $0x120] sm:$0xff]
      %v312 = vld [vmem:[%s1 + $0x128] sm:$0xff]
      %v313 = vld [vmem:[%s1 + $0x130] sm:$0xff]
      %v314 = vld [vmem:[%s1 + $0x138] sm:$0xff]
      %v315 = vld [vmem:[%s1 + $0x140] sm:$0xff]
      %v316 = vld [vmem:[%s1 + $0x148] sm:$0xff]
      %v317 = vld [vmem:[%s1 + $0x150] sm:$0xff]
      %v318 = vld [vmem:[%s1 + $0x158] sm:$0xff]
      %v319 = vld [vmem:[%s1 + $0x160] sm:$0xff]
      %v320 = vld [vmem:[%s1 + $0x168] sm:$0xff]
      %v321 = vld [vmem:[%s1 + $0x170] sm:$0xff]
      %v322 = vld [vmem:[%s1 + $0x178] sm:$0xff]
      %v323 = vld [vmem:[%s2] sm:$0x3]
      %v325 = vperm.slane %v323, 0
      %v326 = vperm.slane %v323, 1
      %v377 = vunpack.c.l.b16 %v275
      %v378 = vunpack.c.h.b16 %v275
      %v379 = vunpack.c.l.b16 %v276
      %v380 = vunpack.c.h.b16 %v276
      %v381 = vunpack.c.l.b16 %v277
      %v382 = vunpack.c.h.b16 %v277
      %v383 = vunpack.c.l.b16 %v278
      %v384 = vunpack.c.h.b16 %v278
      %v385 = vunpack.c.l.b16 %v279
      %v386 = vunpack.c.h.b16 %v279
      %v387 = vunpack.c.l.b16 %v280
      %v388 = vunpack.c.h.b16 %v280
      %v389 = vunpack.c.l.b16 %v281
      %v390 = vunpack.c.h.b16 %v281
      %v391 = vunpack.c.l.b16 %v282
      %v392 = vunpack.c.h.b16 %v282
      %v393 = vunpack.c.l.b16 %v283
      %v394 = vunpack.c.h.b16 %v283
      %v395 = vunpack.c.l.b16 %v284
      %v396 = vunpack.c.h.b16 %v284
      %v397 = vunpack.c.l.b16 %v285
      %v398 = vunpack.c.h.b16 %v285
      %v399 = vunpack.c.l.b16 %v286
      %v400 = vunpack.c.h.b16 %v286
      %v401 = vunpack.c.l.b16 %v287
      %v402 = vunpack.c.h.b16 %v287
      %v403 = vunpack.c.l.b16 %v288
      %v404 = vunpack.c.h.b16 %v288
      %v405 = vunpack.c.l.b16 %v289
      %v406 = vunpack.c.h.b16 %v289
      %v407 = vunpack.c.l.b16 %v290
      %v408 = vunpack.c.h.b16 %v290
      %v409 = vunpack.c.l.b16 %v291
      %v410 = vunpack.c.h.b16 %v291
      %v411 = vunpack.c.l.b16 %v292
      %v412 = vunpack.c.h.b16 %v292
      %v413 = vunpack.c.l.b16 %v293
      %v414 = vunpack.c.h.b16 %v293
      %v415 = vunpack.c.l.b16 %v294
      %v416 = vunpack.c.h.b16 %v294
      %v417 = vunpack.c.l.b16 %v295
      %v418 = vunpack.c.h.b16 %v295
      %v419 = vunpack.c.l.b16 %v296
      %v420 = vunpack.c.h.b16 %v296
      %v421 = vunpack.c.l.b16 %v297
      %v422 = vunpack.c.h.b16 %v297
      %v423 = vunpack.c.l.b16 %v298
      %v424 = vunpack.c.h.b16 %v298
      %v425 = vunpack.c.l.b16 %v299
      %v426 = vunpack.c.h.b16 %v299
      %v427 = vunpack.c.l.b16 %v300
      %v428 = vunpack.c.h.b16 %v300
      %v429 = vunpack.c.l.b16 %v301
      %v430 = vunpack.c.h.b16 %v301
      %v431 = vunpack.c.l.b16 %v302
      %v432 = vunpack.c.h.b16 %v302
      %v433 = vunpack.c.l.b16 %v303
      %v434 = vunpack.c.h.b16 %v303
      %v435 = vunpack.c.l.b16 %v304
      %v436 = vunpack.c.h.b16 %v304
      %v437 = vunpack.c.l.b16 %v305
      %v438 = vunpack.c.h.b16 %v305
      %v439 = vunpack.c.l.b16 %v306
      %v440 = vunpack.c.h.b16 %v306
      %v441 = vunpack.c.l.b16 %v307
      %v442 = vunpack.c.h.b16 %v307
      %v443 = vunpack.c.l.b16 %v308
      %v444 = vunpack.c.h.b16 %v308
      %v445 = vunpack.c.l.b16 %v309
      %v446 = vunpack.c.h.b16 %v309
      %v447 = vunpack.c.l.b16 %v310
      %v448 = vunpack.c.h.b16 %v310
      %v449 = vunpack.c.l.b16 %v311
      %v450 = vunpack.c.h.b16 %v311
      %v451 = vunpack.c.l.b16 %v312
      %v452 = vunpack.c.h.b16 %v312
      %v453 = vunpack.c.l.b16 %v313
      %v454 = vunpack.c.h.b16 %v313
      %v455 = vunpack.c.l.b16 %v314
      %v456 = vunpack.c.h.b16 %v314
      %v457 = vunpack.c.l.b16 %v315
      %v458 = vunpack.c.h.b16 %v315
      %v459 = vunpack.c.l.b16 %v316
      %v460 = vunpack.c.h.b16 %v316
      %v461 = vunpack.c.l.b16 %v317
      %v462 = vunpack.c.h.b16 %v317
      %v463 = vunpack.c.l.b16 %v318
      %v464 = vunpack.c.h.b16 %v318
      %v465 = vunpack.c.l.b16 %v319
      %v466 = vunpack.c.h.b16 %v319
      %v467 = vunpack.c.l.b16 %v320
      %v468 = vunpack.c.h.b16 %v320
      %v469 = vunpack.c.l.b16 %v321
      %v470 = vunpack.c.h.b16 %v321
      %v471 = vunpack.c.l.b16 %v322
      %v472 = vunpack.c.h.b16 %v322
      %v473 = vpack.c.b16 %v379, %v377
      %v474 = vpack.c.b16 %v380, %v378
      %v475 = vpack.c.b16 %v383, %v381
      %v476 = vpack.c.b16 %v384, %v382
      %v477 = vpack.c.b16 %v387, %v385
      %v478 = vpack.c.b16 %v388, %v386
      %v479 = vpack.c.b16 %v391, %v389
      %v480 = vpack.c.b16 %v392, %v390
      %v481 = vpack.c.b16 %v395, %v393
      %v482 = vpack.c.b16 %v396, %v394
      %v483 = vpack.c.b16 %v399, %v397
      %v484 = vpack.c.b16 %v400, %v398
      %v485 = vpack.c.b16 %v403, %v401
      %v486 = vpack.c.b16 %v404, %v402
      %v487 = vpack.c.b16 %v407, %v405
      %v488 = vpack.c.b16 %v408, %v406
      %v489 = vpack.c.b16 %v411, %v409
      %v490 = vpack.c.b16 %v412, %v410
      %v491 = vpack.c.b16 %v415, %v413
      %v492 = vpack.c.b16 %v416, %v414
      %v493 = vpack.c.b16 %v419, %v417
      %v494 = vpack.c.b16 %v420, %v418
      %v495 = vpack.c.b16 %v423, %v421
      %v496 = vpack.c.b16 %v424, %v422
      %v497 = vpack.c.b16 %v427, %v425
      %v498 = vpack.c.b16 %v428, %v426
      %v499 = vpack.c.b16 %v431, %v429
      %v500 = vpack.c.b16 %v432, %v430
      %v501 = vpack.c.b16 %v435, %v433
      %v502 = vpack.c.b16 %v436, %v434
      %v503 = vpack.c.b16 %v439, %v437
      %v504 = vpack.c.b16 %v440, %v438
      %v505 = vpack.c.b16 %v443, %v441
      %v506 = vpack.c.b16 %v444, %v442
      %v507 = vpack.c.b16 %v447, %v445
      %v508 = vpack.c.b16 %v448, %v446
      %v509 = vpack.c.b16 %v451, %v449
      %v510 = vpack.c.b16 %v452, %v450
      %v511 = vpack.c.b16 %v455, %v453
      %v512 = vpack.c.b16 %v456, %v454
      %v513 = vpack.c.b16 %v459, %v457
      %v514 = vpack.c.b16 %v460, %v458
      %v515 = vpack.c.b16 %v463, %v461
      %v516 = vpack.c.b16 %v464, %v462
      %v517 = vpack.c.b16 %v467, %v465
      %v518 = vpack.c.b16 %v468, %v466
      %v519 = vpack.c.b16 %v471, %v469
      %v520 = vpack.c.b16 %v472, %v470
      %569 = vmatpush.bf16.msra.mxu0 %v487
      %570 = vmatpush.bf16.msra.mxu0 %v485
      %571 = vmatpush.bf16.msra.mxu0 %v483
      %572 = vmatpush.bf16.msra.mxu0 %v481
      %573 = vmatpush.bf16.msra.mxu0 %v479
      %574 = vmatpush.bf16.msra.mxu0 %v477
      %575 = vmatpush.bf16.msra.mxu0 %v475
      %576 = vmatpush.bf16.msra.mxu0 %v473
      %577 = vmatmul.bf16.gmra.mxu0 %v272
      %v578 = vpop.f32.mrf.mxu0
      %v579 = vadd.f32 %v325, %v578
      %v580 = vpop.f32.mrf.mxu0
      %v581 = vadd.f32 %v325, %v580
      %582 = vdwg.mxu0
      %583 = vmatpush.bf16.msra.mxu0 %v503
      %584 = vmatpush.bf16.msra.mxu0 %v501
      %585 = vmatpush.bf16.msra.mxu0 %v499
      %586 = vmatpush.bf16.msra.mxu0 %v497
      %587 = vmatpush.bf16.msra.mxu0 %v495
      %588 = vmatpush.bf16.msra.mxu0 %v493
      %589 = vmatpush.bf16.msra.mxu0 %v491
      %590 = vmatpush.bf16.msra.mxu0 %v489
      %591 = vmatmul.bf16.gmra.mxu0 %v273
      %v592 = vpop.f32.mrf.mxu0
      %v593 = vadd.f32 %v579, %v592
      %v594 = vpop.f32.mrf.mxu0
      %v595 = vadd.f32 %v581, %v594
      %596 = vdwg.mxu0
      %597 = vmatpush.bf16.msra.mxu0 %v519
      %598 = vmatpush.bf16.msra.mxu0 %v517
      %599 = vmatpush.bf16.msra.mxu0 %v515
      %600 = vmatpush.bf16.msra.mxu0 %v513
      %601 = vmatpush.bf16.msra.mxu0 %v511
      %602 = vmatpush.bf16.msra.mxu0 %v509
      %603 = vmatpush.bf16.msra.mxu0 %v507
      %604 = vmatpush.bf16.msra.mxu0 %v505
      %605 = vmatmul.bf16.gmra.mxu0 %v274
      %v606 = vpop.f32.mrf.mxu0
      %v607 = vadd.f32 %v593, %v606
      %v608 = vpop.f32.mrf.mxu0
      %v609 = vadd.f32 %v595, %v608
      %610 = vdwg.mxu0
      %611 = vmatpush.bf16.msra.mxu0 %v488
      %612 = vmatpush.bf16.msra.mxu0 %v486
      %613 = vmatpush.bf16.msra.mxu0 %v484
      %614 = vmatpush.bf16.msra.mxu0 %v482
      %615 = vmatpush.bf16.msra.mxu0 %v480
      %616 = vmatpush.bf16.msra.mxu0 %v478
      %617 = vmatpush.bf16.msra.mxu0 %v476
      %618 = vmatpush.bf16.msra.mxu0 %v474
      %619 = vmatmul.bf16.gmra.mxu0 %v272
      %v620 = vpop.f32.mrf.mxu0
      %v621 = vadd.f32 %v326, %v620
      %v622 = vpop.f32.mrf.mxu0
      %v623 = vadd.f32 %v326, %v622
      %624 = vdwg.mxu0
      %625 = vmatpush.bf16.msra.mxu0 %v504
      %626 = vmatpush.bf16.msra.mxu0 %v502
      %627 = vmatpush.bf16.msra.mxu0 %v500
      %628 = vmatpush.bf16.msra.mxu0 %v498
      %629 = vmatpush.bf16.msra.mxu0 %v496
      %630 = vmatpush.bf16.msra.mxu0 %v494
      %631 = vmatpush.bf16.msra.mxu0 %v492
      %632 = vmatpush.bf16.msra.mxu0 %v490
      %633 = vmatmul.bf16.gmra.mxu0 %v273
      %v634 = vpop.f32.mrf.mxu0
      %v635 = vadd.f32 %v621, %v634
      %v636 = vpop.f32.mrf.mxu0
      %v637 = vadd.f32 %v623, %v636
      %638 = vdwg.mxu0
      %639 = vmatpush.bf16.msra.mxu0 %v520
      %640 = vmatpush.bf16.msra.mxu0 %v518
      %641 = vmatpush.bf16.msra.mxu0 %v516
      %642 = vmatpush.bf16.msra.mxu0 %v514
      %643 = vmatpush.bf16.msra.mxu0 %v512
      %644 = vmatpush.bf16.msra.mxu0 %v510
      %645 = vmatpush.bf16.msra.mxu0 %v508
      %646 = vmatpush.bf16.msra.mxu0 %v506
      %647 = vmatmul.bf16.gmra.mxu0 %v274
      %v648 = vpop.f32.mrf.mxu0
      %v649 = vadd.f32 %v635, %v648
      %v650 = vpop.f32.mrf.mxu0
      %v651 = vadd.f32 %v637, %v650
      %652 = vdwg.mxu0
      %v653 = vmax.f32 %v607, 0.0
      %v654 = vmax.f32 %v609, 0.0
      %v655 = vrot.slane %v653, 7
      %v656 = vrot.slane %v654, 7
      %v657 = vsel %vm258, %v655, %v656
      %v658 = vsel %vm258, %v656, %v655
      %v659 = vsel %vm254, 0.0, %v658
      %v660 = vsel %vm255, 0.0, %v657
      %v661 = vrot.slane %v653, 1
      %v662 = vrot.slane %v654, 1
      %v663 = vsel %vm267, %v661, %v662
      %v664 = vsel %vm267, %v662, %v661
      %v665 = vsel %vm263, 0.0, %v663
      %v666 = vsel %vm264, 0.0, %v664
      %v667 = vpack.c.bf16 %v660, %v659
      %v668 = vpack.c.bf16 %v654, %v653
      %v669 = vpack.c.bf16 %v666, %v665
      %v670 = vld [vmem:[%s3] sm:$0xf]
      %v671 = vld [vmem:[%s3 + $0x4] sm:$0xf]
      %v672 = vld [vmem:[%s3 + $0x8] sm:$0xf]
      %v673 = vld [vmem:[%s3 + $0xc] sm:$0xf]
      %v674 = vld [vmem:[%s3 + $0x10] sm:$0xf]
      %v675 = vld [vmem:[%s3 + $0x14] sm:$0xf]
      %v676 = vld [vmem:[%s3 + $0x18] sm:$0xf]
      %v677 = vld [vmem:[%s3 + $0x1c] sm:$0xf]
      %v678 = vld [vmem:[%s3 + $0x20] sm:$0xf]
      %v679 = vld [vmem:[%s3 + $0x24] sm:$0xf]
      %v680 = vld [vmem:[%s3 + $0x28] sm:$0xf]
      %v681 = vld [vmem:[%s3 + $0x2c] sm:$0xf]
      %v682 = vld [vmem:[%s3 + $0x30] sm:$0xf]
      %v683 = vld [vmem:[%s3 + $0x34] sm:$0xf]
      %v684 = vld [vmem:[%s3 + $0x38] sm:$0xf]
      %v685 = vld [vmem:[%s3 + $0x3c] sm:$0xf]
      %v686 = vld [vmem:[%s3 + $0x40] sm:$0xf]
      %v687 = vld [vmem:[%s3 + $0x44] sm:$0xf]
      %v688 = vld [vmem:[%s3 + $0x48] sm:$0xf]
      %v689 = vld [vmem:[%s3 + $0x4c] sm:$0xf]
      %v690 = vld [vmem:[%s3 + $0x50] sm:$0xf]
      %v691 = vld [vmem:[%s3 + $0x54] sm:$0xf]
      %v692 = vld [vmem:[%s3 + $0x58] sm:$0xf]
      %v693 = vld [vmem:[%s3 + $0x5c] sm:$0xf]
      %v694 = vld [vmem:[%s3 + $0x60] sm:$0xf]
      %v695 = vld [vmem:[%s3 + $0x64] sm:$0xf]
      %v696 = vld [vmem:[%s3 + $0x68] sm:$0xf]
      %v697 = vld [vmem:[%s3 + $0x6c] sm:$0xf]
      %v698 = vld [vmem:[%s3 + $0x70] sm:$0xf]
      %v699 = vld [vmem:[%s3 + $0x74] sm:$0xf]
      %v700 = vld [vmem:[%s3 + $0x78] sm:$0xf]
      %v701 = vld [vmem:[%s3 + $0x7c] sm:$0xf]
      %v702 = vld [vmem:[%s3 + $0x80] sm:$0xf]
      %v703 = vld [vmem:[%s3 + $0x84] sm:$0xf]
      %v704 = vld [vmem:[%s3 + $0x88] sm:$0xf]
      %v705 = vld [vmem:[%s3 + $0x8c] sm:$0xf]
      %v706 = vld [vmem:[%s3 + $0x90] sm:$0xf]
      %v707 = vld [vmem:[%s3 + $0x94] sm:$0xf]
      %v708 = vld [vmem:[%s3 + $0x98] sm:$0xf]
      %v709 = vld [vmem:[%s3 + $0x9c] sm:$0xf]
      %v710 = vld [vmem:[%s3 + $0xa0] sm:$0xf]
      %v711 = vld [vmem:[%s3 + $0xa4] sm:$0xf]
      %v712 = vld [vmem:[%s3 + $0xa8] sm:$0xf]
      %v713 = vld [vmem:[%s3 + $0xac] sm:$0xf]
      %v714 = vld [vmem:[%s3 + $0xb0] sm:$0xf]
      %v715 = vld [vmem:[%s3 + $0xb4] sm:$0xf]
      %v716 = vld [vmem:[%s3 + $0xb8] sm:$0xf]
      %v717 = vld [vmem:[%s3 + $0xbc] sm:$0xf]
      %v718 = vld [vmem:[%s4] sm:$0x1]
      %v720 = vperm.slane %v718, 0
      %v770 = vunpack.c.l.b16 %v670
      %v771 = vunpack.c.l.b16 %v671
      %v772 = vunpack.c.l.b16 %v672
      %v773 = vunpack.c.l.b16 %v673
      %v774 = vunpack.c.l.b16 %v674
      %v775 = vunpack.c.l.b16 %v675
      %v776 = vunpack.c.l.b16 %v676
      %v777 = vunpack.c.l.b16 %v677
      %v778 = vunpack.c.l.b16 %v678
      %v779 = vunpack.c.l.b16 %v679
      %v780 = vunpack.c.l.b16 %v680
      %v781 = vunpack.c.l.b16 %v681
      %v782 = vunpack.c.l.b16 %v682
      %v783 = vunpack.c.l.b16 %v683
      %v784 = vunpack.c.l.b16 %v684
      %v785 = vunpack.c.l.b16 %v685
      %v786 = vunpack.c.l.b16 %v686
      %v787 = vunpack.c.l.b16 %v687
      %v788 = vunpack.c.l.b16 %v688
      %v789 = vunpack.c.l.b16 %v689
      %v790 = vunpack.c.l.b16 %v690
      %v791 = vunpack.c.l.b16 %v691
      %v792 = vunpack.c.l.b16 %v692
      %v793 = vunpack.c.l.b16 %v693
      %v794 = vunpack.c.l.b16 %v694
      %v795 = vunpack.c.l.b16 %v695
      %v796 = vunpack.c.l.b16 %v696
      %v797 = vunpack.c.l.b16 %v697
      %v798 = vunpack.c.l.b16 %v698
      %v799 = vunpack.c.l.b16 %v699
      %v800 = vunpack.c.l.b16 %v700
      %v801 = vunpack.c.l.b16 %v701
      %v802 = vunpack.c.l.b16 %v702
      %v803 = vunpack.c.l.b16 %v703
      %v804 = vunpack.c.l.b16 %v704
      %v805 = vunpack.c.l.b16 %v705
      %v806 = vunpack.c.l.b16 %v706
      %v807 = vunpack.c.l.b16 %v707
      %v808 = vunpack.c.l.b16 %v708
      %v809 = vunpack.c.l.b16 %v709
      %v810 = vunpack.c.l.b16 %v710
      %v811 = vunpack.c.l.b16 %v711
      %v812 = vunpack.c.l.b16 %v712
      %v813 = vunpack.c.l.b16 %v713
      %v814 = vunpack.c.l.b16 %v714
      %v815 = vunpack.c.l.b16 %v715
      %v816 = vunpack.c.l.b16 %v716
      %v817 = vunpack.c.l.b16 %v717
      %v818 = vpack.c.b16 %v771, %v770
      %v819 = vpack.c.b16 %v773, %v772
      %v820 = vpack.c.b16 %v775, %v774
      %v821 = vpack.c.b16 %v777, %v776
      %v822 = vpack.c.b16 %v779, %v778
      %v823 = vpack.c.b16 %v781, %v780
      %v824 = vpack.c.b16 %v783, %v782
      %v825 = vpack.c.b16 %v785, %v784
      %v826 = vpack.c.b16 %v787, %v786
      %v827 = vpack.c.b16 %v789, %v788
      %v828 = vpack.c.b16 %v791, %v790
      %v829 = vpack.c.b16 %v793, %v792
      %v830 = vpack.c.b16 %v795, %v794
      %v831 = vpack.c.b16 %v797, %v796
      %v832 = vpack.c.b16 %v799, %v798
      %v833 = vpack.c.b16 %v801, %v800
      %v834 = vpack.c.b16 %v803, %v802
      %v835 = vpack.c.b16 %v805, %v804
      %v836 = vpack.c.b16 %v807, %v806
      %v837 = vpack.c.b16 %v809, %v808
      %v838 = vpack.c.b16 %v811, %v810
      %v839 = vpack.c.b16 %v813, %v812
      %v840 = vpack.c.b16 %v815, %v814
      %v841 = vpack.c.b16 %v817, %v816
      %866 = vmatpush.bf16.msra.mxu0 %v825
      %867 = vmatpush.bf16.msra.mxu0 %v824
      %868 = vmatpush.bf16.msra.mxu0 %v823
      %869 = vmatpush.bf16.msra.mxu0 %v822
      %870 = vmatpush.bf16.msra.mxu0 %v821
      %871 = vmatpush.bf16.msra.mxu0 %v820
      %872 = vmatpush.bf16.msra.mxu0 %v819
      %873 = vmatpush.bf16.msra.mxu0 %v818
      %874 = vmatmul.bf16.gmra.mxu0 %v667
      %v875 = vpop.f32.mrf.mxu0
      %v876 = vadd.f32 %v720, %v875
      %v877 = vpop.f32.mrf.mxu0
      %v878 = vadd.f32 %v720, %v877
      %879 = vdwg.mxu0
      %880 = vmatpush.bf16.msra.mxu0 %v833
      %881 = vmatpush.bf16.msra.mxu0 %v832
      %882 = vmatpush.bf16.msra.mxu0 %v831
      %883 = vmatpush.bf16.msra.mxu0 %v830
      %884 = vmatpush.bf16.msra.mxu0 %v829
      %885 = vmatpush.bf16.msra.mxu0 %v828
      %886 = vmatpush.bf16.msra.mxu0 %v827
      %887 = vmatpush.bf16.msra.mxu0 %v826
      %888 = vmatmul.bf16.gmra.mxu0 %v668
      %v889 = vpop.f32.mrf.mxu0
      %v890 = vadd.f32 %v876, %v889
      %v891 = vpop.f32.mrf.mxu0
      %v892 = vadd.f32 %v878, %v891
      %893 = vdwg.mxu0
      %894 = vmatpush.bf16.msra.mxu0 %v841
      %895 = vmatpush.bf16.msra.mxu0 %v840
      %896 = vmatpush.bf16.msra.mxu0 %v839
      %897 = vmatpush.bf16.msra.mxu0 %v838
      %898 = vmatpush.bf16.msra.mxu0 %v837
      %899 = vmatpush.bf16.msra.mxu0 %v836
      %900 = vmatpush.bf16.msra.mxu0 %v835
      %901 = vmatpush.bf16.msra.mxu0 %v834
      %902 = vmatmul.bf16.gmra.mxu0 %v669
      %v903 = vpop.f32.mrf.mxu0
      %v904 = vadd.f32 %v890, %v903
      %v905 = vpop.f32.mrf.mxu0
      %v906 = vadd.f32 %v892, %v905
      %907 = vdwg.mxu0
      %v908 = vadd.f32 %v904, %v649
      %v909 = vadd.f32 %v906, %v651
      %v910 = vmax.f32 %v908, 0.0
      %v911 = vmax.f32 %v909, 0.0
      %912 = vst [vmem:[%s224] sm:$0xff] %v910
      %913 = vst [vmem:[%s224 + $0x8] sm:$0xff] %v911
      %p914 = scmp.lt.s32.totalorder %s16, 1
      %s915 = scalar_select %p914, %s16, 1
      %s916 = smul.addr %s915, 2
      %s917 = smul.addr %s916, 8
      %s918 = scalar_lea.vmem %s5, %s917
      // Predicated region
      $region41: #{residual_block_pallas.1} parent=39 // pred_check
        %p919 = pneg %p144
      $region42: #{residual_block_pallas.1} parent=39 // pred_check_branch
        %921 = sbr.rel (%p919) target = $region44
      $region43: #{residual_block_pallas.1} parent=39 // pred_region
        _
      $region44: #{residual_block_pallas.1} parent=39 // pred_fallthru
        _
    $region40: #{residual_block_pallas.1} parent=5 // pred_fallthru
      _
    %p922 = scmp.le.s32.totalorder 2, %s11
    // Predicated region
    $region45: #{residual_block_pallas.1} parent=5 // pred_check
      %p923 = pneg %p922
    $region46: #{residual_block_pallas.1} parent=5 // pred_check_branch
      %925 = sbr.rel (%p923) target = $region48
    $region47: #{residual_block_pallas.1} parent=5 // pred_region
      %s926 = ssub.s32 %s11, 2
      // Predicated region
      $region49: #{residual_block_pallas.1} parent=47 // pred_check
        %p927 = pneg %p150
      $region50: #{residual_block_pallas.1} parent=47 // pred_check_branch
        %929 = sbr.rel (%p927) target = $region52
      $region51: #{residual_block_pallas.1} parent=47 // pred_region
        %p930 = scmp.lt.s32.totalorder %s17, 1
        %s931 = scalar_select %p930, %s17, 1
        %s932 = smul.addr %s931, 2
        %s933 = smul.addr %s932, 8
        %s934 = scalar_lea.vmem %s5, %s933
      $region52: #{residual_block_pallas.1} parent=47 // pred_fallthru
        _
    $region48: #{residual_block_pallas.1} parent=5 // pred_fallthru
      _
  $region6: #{residual_block_pallas.1} parent=0 // loop_footer
    %s15 = sadd.s32 1, %s11
  $region7: #{residual_block_pallas.1} parent=0 // loop_footer_branch
    %10 = sbr.rel target = $region3
  $region8: #{residual_block_pallas.1} parent=0 // loop_exit
    _

</llo_original>
